<compile_context>
chip_gen: v6e
topology: v6e:2x2x1
jax: 0.10.0
libtpu: 0.0.40
codegen_flags: <defaults>
</compile_context>

<pallas_src>
import functools

import jax
import jax.numpy as jnp
from jax import lax
from jax.experimental import pallas as pl
from jax.experimental.pallas import tpu as pltpu


def _round_up(x, m):
    return ((x + m - 1) // m) * m


def _nearest_resize_nchw(x, out_h, out_w):
    """torch F.interpolate(mode='nearest') equivalent on NCHW."""
    n, c, h, w = x.shape
    if (h, w) == (out_h, out_w):
        return x
    rows = (jnp.arange(out_h) * h) // out_h
    cols = (jnp.arange(out_w) * w) // out_w
    return x[:, :, rows[:, None], cols[None, :]]


def _find_local_patch_rows(x, patch_size):
    """F.unfold(kernel=p, pad=p//2, stride=1), row-major rows: (N, H*W, C*p*p).

    The 1x NCHW tensor is transposed to NHWC once, then the 9x unfolded tensor
    is assembled directly in (HW, K) layout (no relayout pass over the 9x
    tensor).  Column order matches torch's (c*p*p + kh*p + kw); in any case
    L @ L^T is invariant to a permutation of the K columns.
    """
    # TODO(synk): fold the p**2 unfold into the kernel with offset DMAs of the
    # NCHW feature to avoid materializing the 9x tensor in HBM at all.
    n, c, h, w = x.shape
    pad = patch_size // 2
    x_nhwc = jnp.transpose(x, (0, 2, 3, 1))
    xp = jnp.pad(x_nhwc, ((0, 0), (pad, pad), (pad, pad), (0, 0)))
    cols = [xp[:, kh:kh + h, kw:kw + w, :]
            for kh in range(patch_size) for kw in range(patch_size)]
    loc = jnp.stack(cols, axis=-1)            # (N, H, W, C, p*p)
    return loc.reshape(n, h * w, c * patch_size * patch_size)


def _nonlocal_kernel(lq_ref, lk_ref, ab_ref, o_ref, m_sc, acc_sc, *, inv_alpha):
    # lq_ref : (1, TQ,  Kp)   query rows of L            (per q-tile)
    # lk_ref : (1, TKV, Kp)   key rows of L              (per kv-tile)
    # ab_ref : (1, 8,  TKV)   rows [a, b, ones, 0...]    (per kv-tile)
    # o_ref  : (1, 2,  TQ)    lane-dense NCHW-flattened output tile
    # m_sc   : (1, TQ)  running max; acc_sc : (8, TQ) running [a, b, denom, ..]
    kv = pl.program_id(2)

    @pl.when(kv == 0)
    def _():
        m_sc[...] = jnp.full(m_sc.shape, -jnp.inf, m_sc.dtype)
        acc_sc[...] = jnp.zeros(acc_sc.shape, acc_sc.dtype)

    # transposed raw scores (TKV, TQ): NT contraction over K, no transpose copy
    s_t = lax.dot_general(lk_ref[0], lq_ref[0], (((1,), (1,)), ((), ())),
                          preferred_element_type=jnp.float32)
    # 1/alpha applied to the (TKV, TQ) scores — ~9x fewer VPU multiplies than
    # rescaling the (TQ, Kp) query tile each step, and no scaled-q copy.
    s_t = s_t * inv_alpha

    # No padding mask needed: padded keys have zero L rows (score exactly 0,
    # never above the >= 0 self-correlation of a valid query) and zero
    # ab/ones rows, so they add nothing to numerator or denominator.
    m_cur = jnp.max(s_t, axis=0, keepdims=True)           # (1, TQ)
    m_new = jnp.maximum(m_sc[...], m_cur)
    rescale = jnp.exp(m_sc[...] - m_new)                   # (1, TQ)
    p_t = jnp.exp(s_t - m_new)                             # (TKV, TQ)

    # The "ones" row of ab accumulates the softmax denominator for free
    # inside the same MXU contraction (no cross-lane reduction needed).
    wab_t = lax.dot_general(ab_ref[0], p_t, (((1,), (0,)), ((), ())),
                            preferred_element_type=jnp.float32)   # (8, TQ)

    acc_sc[...] = rescale * acc_sc[...] + wab_t
    m_sc[...] = m_new

    @pl.when(kv == pl.num_programs(2) - 1)
    def _():
        acc = acc_sc[...]                                   # (8, TQ)
        denom = acc[2:3, :]
        inv = pl.reciprocal(denom, approx=True)
        inv = inv * (2.0 - denom * inv)                     # one Newton step
        o_ref[0] = acc[0:2, :] * inv                        # lane-dense store


def nonlocal_weighted_average(x_lab, feature, patch_size=3, alpha=0.1,
                              scale_factor=1):
    x_lab = x_lab.astype(jnp.float32)
    feature = feature.astype(jnp.float32)

    # F.interpolate(x_lab, scale_factor=scale_factor)  (nearest)
    if scale_factor != 1:
        _, _, h0, w0 = x_lab.shape
        x_lab = _nearest_resize_nchw(x_lab, int(h0 * scale_factor),
                                     int(w0 * scale_factor))
    n, _, h, w = x_lab.shape
    hw = h * w

    # F.interpolate(feature, size=(h, w))  (nearest)
    feature = _nearest_resize_nchw(feature, h, w)

    # local unfolded feature, rows = spatial positions: (N, HW, K)
    l_mat = _find_local_patch_rows(feature, patch_size)
    k_dim = l_mat.shape[-1]

    # ab channels in natural NCHW-flattened layout + "ones" denominator row,
    # padded to 8 rows: (N, 8, HW).  No (0,2,1) transpose needed anywhere.
    x_ab = x_lab[:, 1:3, :, :].reshape(n, 2, hw)
    ab_ext = jnp.concatenate(
        [x_ab,
         jnp.ones((n, 1, hw), jnp.float32),
         jnp.zeros((n, 5, hw), jnp.float32)], axis=1)

    # Asymmetric flash tiles: TKV fixed at 256 (MXU-sized), TQ up to 512 so the
    # key stream (re-read HW/TQ times, the dominant HBM traffic) is re-read 2x
    # less often than with symmetric 256x256 tiles.  TQ is a multiple of TKV so
    # one HW padding serves both.  (TQ=512 also keeps v7x's 64 MiB VMEM safe;
    # v5e/v6e could go to 1024.)
    tkv = min(256, _round_up(hw, 128))
    tq = min(512, _round_up(hw, tkv))
    hw_pad = _round_up(hw, tq)
    k_pad = _round_up(k_dim, 128)         # zero-pad K: does not change L @ L^T

    l_mat = jnp.pad(l_mat, ((0, 0), (0, hw_pad - hw), (0, k_pad - k_dim)))
    ab_ext = jnp.pad(ab_ext, ((0, 0), (0, 0), (0, hw_pad - hw)))

    grid = (n, hw_pad // tq, hw_pad // tkv)

    # VMEM budget from actual buffer sizes (double-buffered inputs/outputs +
    # scratch + headroom for the (TKV, TQ) score/prob intermediates).
    f32 = 4
    vmem_bytes = (2 * tq * k_pad * f32          # lq double buffer
                  + 2 * tkv * k_pad * f32       # lk double buffer
                  + 2 * 8 * tkv * f32           # ab double buffer
                  + 2 * 2 * tq * f32            # out double buffer
                  + 9 * tq * f32                # m/acc scratch
                  + 4 * tkv * tq * f32          # s_t / p_t intermediates
                  + (8 << 20))                  # slack
    vmem_limit = int(max(32 << 20, min(vmem_bytes, 64 << 20)))

    kernel = functools.partial(_nonlocal_kernel, inv_alpha=float(1.0 / alpha))

    out = pl.pallas_call(
        kernel,
        out_shape=jax.ShapeDtypeStruct((n, 2, hw_pad), jnp.float32),
        grid_spec=pltpu.PrefetchScalarGridSpec(
            num_scalar_prefetch=0,
            grid=grid,
            in_specs=[
                pl.BlockSpec((1, tq, k_pad), lambda b, q, kv: (b, q, 0)),
                pl.BlockSpec((1, tkv, k_pad), lambda b, q, kv: (b, kv, 0)),
                pl.BlockSpec((1, 8, tkv), lambda b, q, kv: (b, 0, kv)),
            ],
            out_specs=pl.BlockSpec((1, 2, tq), lambda b, q, kv: (b, 0, q)),
            scratch_shapes=[
                pltpu.VMEM((1, tq), jnp.float32),   # running max
                pltpu.VMEM((8, tq), jnp.float32),   # [a, b, denom, pad] acc
            ]),
        compiler_params=pltpu.CompilerParams(
            dimension_semantics=("parallel", "parallel", "arbitrary"),
            vmem_limit_bytes=vmem_limit),
    )(l_mat, l_mat, ab_ext)

    # (N, 2, HW_pad) -> (N, 2, H, W): slice padding; already NCHW-ordered.
    return out[:, :, :hw].reshape(n, 2, h, w)


def _reference(x_lab, feature, patch_size=3, alpha=0.1, scale_factor=1):
    """Pure-JAX reference of the PyTorch forward for verification.

    NOTE: the einsums MUST use Precision.HIGHEST.  With the TPU default
    precision the operands are truncated to bf16; the resulting O(1) logit
    noise is exponentiated by the alpha=0.1 softmax and (for near-tied
    logits, e.g. nearest-upsampled features) shifts the *reference* output by
    far more than the test tolerance — this is what failed the previous run.
    """
    hi = lax.Precision.HIGHEST
    x_lab = x_lab.astype(jnp.float32)
    feature = feature.astype(jnp.float32)
    if scale_factor != 1:
        _, _, h0, w0 = x_lab.shape
        x_lab = _nearest_resize_nchw(x_lab, int(h0 * scale_factor),
                                     int(w0 * scale_factor))
    n, _, h, w = x_lab.shape
    hw = h * w
    feature = _nearest_resize_nchw(feature, h, w)
    x_ab = x_lab[:, 1:3, :, :].reshape(n, 2, hw).transpose(0, 2, 1)
    l_mat = _find_local_patch_rows(feature, patch_size)
    corr = jnp.einsum('nik,njk->nij', l_mat, l_mat, precision=hi) / alpha
    corr = jax.nn.softmax(corr, axis=-1)
    wab = jnp.einsum('nij,njc->nic', corr, x_ab, precision=hi)
    return wab.transpose(0, 2, 1).reshape(n, 2, h, w)


if __name__ == "__main__":
    key = jax.random.PRNGKey(0)
    k1, k2, k3, k4, k5, k6 = jax.random.split(key, 6)

    # Case 1: HW = 256 -> single tile, no padding.
    x_lab1 = jax.random.normal(k1, (2, 3, 16, 16), dtype=jnp.float32)
    feat1 = jax.random.normal(k2, (2, 4, 16, 16), dtype=jnp.float32)
    out1 = jax.block_until_ready(
        nonlocal_weighted_average(x_lab1, feat1, patch_size=3, alpha=0.1))
    ref1 = jax.block_until_ready(_reference(x_lab1, feat1))
    assert out1.shape == (2, 2, 16, 16)
    assert jnp.allclose(out1, ref1, atol=2e-3, rtol=2e-3), \
        float(jnp.max(jnp.abs(out1 - ref1)))

    # Case 2 (previously failing): HW = 400 padded to 512, 2 kv tiles, nearest-
    # upsampled feature (near-duplicate patches -> near-tied softmax logits).
    x_lab2 = jax.random.normal(k3, (2, 3, 20, 20), dtype=jnp.float32)
    feat2 = jax.random.normal(k4, (2, 4, 10, 10), dtype=jnp.float32)
    out2 = jax.block_until_ready(
        nonlocal_weighted_average(x_lab2, feat2, patch_size=3, alpha=0.1))
    ref2 = jax.block_until_ready(_reference(x_lab2, feat2))
    assert out2.shape == (2, 2, 20, 20)
    assert jnp.allclose(out2, ref2, atol=2e-3, rtol=2e-3), \
        float(jnp.max(jnp.abs(out2 - ref2)))

    # Case 3: scale_factor=2 -> HW = 576 padded to 1024: 2 q tiles, 4 kv tiles,
    # last kv tile entirely padding (exercises the mask-free padding path and
    # both nearest interpolations).
    x_lab3 = jax.random.normal(k5, (1, 3, 12, 12), dtype=jnp.float32)
    feat3 = jax.random.normal(k6, (1, 4, 12, 12), dtype=jnp.float32)
    out3 = jax.block_until_ready(
        nonlocal_weighted_average(x_lab3, feat3, patch_size=3, alpha=0.1,
                                  scale_factor=2))
    ref3 = jax.block_until_ready(_reference(x_lab3, feat3, scale_factor=2))
    assert out3.shape == (1, 2, 24, 24)
    assert jnp.allclose(out3, ref3, atol=2e-3, rtol=2e-3), \
        float(jnp.max(jnp.abs(out3 - ref3)))

    print("KERNEL_OK")
</pallas_src>

<mosaic_0001>
module attributes {stable_mosaic.version = 11 : i64} {
  func.func @_nonlocal_kernel(%arg0: i32, %arg1: i32, %arg2: i32, %arg3: memref<1x256x128xf32, #tpu.memory_space<vmem>>, %arg4: memref<1x256x128xf32, #tpu.memory_space<vmem>>, %arg5: memref<1x8x256xf32, #tpu.memory_space<vmem>>, %arg6: memref<1x2x256xf32, #tpu.memory_space<vmem>>, %arg7: memref<1x256xf32, #tpu.memory_space<vmem>>, %arg8: memref<8x256xf32, #tpu.memory_space<vmem>>) attributes {dimension_semantics = [#tpu.dimension_semantics<parallel>, #tpu.dimension_semantics<parallel>, #tpu.dimension_semantics<arbitrary>], iteration_bounds = array<i64: 2, 1, 1>, scalar_prefetch = 0 : i64, scratch_operands = 2 : i64, tpu.core_type = #tpu.core_type<tc>, window_params = [{transform_indices = @transform_0, window_bounds = array<i64: 1, 256, 128>}, {transform_indices = @transform_1, window_bounds = array<i64: 1, 256, 128>}, {transform_indices = @transform_2, window_bounds = array<i64: 1, 8, 256>}, {transform_indices = @transform_3, window_bounds = array<i64: 1, 2, 256>}]} {
    %c0_i32 = arith.constant 0 : i32
    %0 = arith.cmpi eq, %arg2, %c0_i32 : i32
    %1 = arith.extui %0 : i1 to i32
    %c0_i32_0 = arith.constant 0 : i32
    %2 = arith.cmpi ne, %1, %c0_i32_0 : i32
    scf.if %2 {
      %cst_24 = arith.constant 0xFF800000 : f32
      %32 = vector.broadcast %cst_24 : f32 to vector<1x256xf32>
      %c0_25 = arith.constant 0 : index
      %c0_26 = arith.constant 0 : index
      %33 = vector.load %arg7[%c0_25, %c0_26] : memref<1x256xf32, #tpu.memory_space<vmem>>, vector<1x256xf32>
      tpu.vector_store %arg7[%c0_25, %c0_26], %32 {strides = array<i32>} : memref<1x256xf32, #tpu.memory_space<vmem>>, vector<1x256xf32>,
      %cst_27 = arith.constant 0.000000e+00 : f32
      %34 = vector.broadcast %cst_27 : f32 to vector<8x256xf32>
      %c0_28 = arith.constant 0 : index
      %c0_29 = arith.constant 0 : index
      %35 = vector.load %arg8[%c0_28, %c0_29] : memref<8x256xf32, #tpu.memory_space<vmem>>, vector<8x256xf32>
      tpu.vector_store %arg8[%c0_28, %c0_29], %34 {strides = array<i32>} : memref<8x256xf32, #tpu.memory_space<vmem>>, vector<8x256xf32>,
    } else {
    }
    %c0 = arith.constant 0 : index
    %c0_1 = arith.constant 0 : index
    %c0_2 = arith.constant 0 : index
    %3 = vector.load %arg4[%c0, %c0_1, %c0_2] : memref<1x256x128xf32, #tpu.memory_space<vmem>>, vector<1x256x128xf32>
    %4 = vector.shape_cast %3 : vector<1x256x128xf32> to vector<256x128xf32>
    %c0_3 = arith.constant 0 : index
    %c0_4 = arith.constant 0 : index
    %c0_5 = arith.constant 0 : index
    %5 = vector.load %arg3[%c0_3, %c0_4, %c0_5] : memref<1x256x128xf32, #tpu.memory_space<vmem>>, vector<1x256x128xf32>
    %6 = vector.shape_cast %5 : vector<1x256x128xf32> to vector<256x128xf32>
    %cst = arith.constant dense<0.000000e+00> : vector<256x256xf32>
    %7 = tpu.matmul %4, %6, %cst {dimension_numbers = #tpu.dot_dimension_numbers<[1], [1], [0], [0], [0, 0, 1, 0], [], []>} : vector<256x128xf32>, vector<256x128xf32>, vector<256x256xf32> -> vector<256x256xf32>
    %cst_6 = arith.constant 1.000000e+01 : f32
    %8 = vector.broadcast %cst_6 : f32 to vector<256x256xf32>
    %9 = arith.mulf %7, %8 : vector<256x256xf32>
    %cst_7 = arith.constant dense<0xFF800000> : vector<256xf32>
    %10 = vector.multi_reduction <maximumf>, %9, %cst_7 [0] : vector<256x256xf32> to vector<256xf32>
    %11 = vector.shape_cast %10 : vector<256xf32> to vector<1x256xf32>
    %c0_8 = arith.constant 0 : index
    %c0_9 = arith.constant 0 : index
    %12 = vector.load %arg7[%c0_8, %c0_9] : memref<1x256xf32, #tpu.memory_space<vmem>>, vector<1x256xf32>
    %13 = arith.maximumf %12, %11 : vector<1x256xf32>
    %c0_10 = arith.constant 0 : index
    %c0_11 = arith.constant 0 : index
    %14 = vector.load %arg7[%c0_10, %c0_11] : memref<1x256xf32, #tpu.memory_space<vmem>>, vector<1x256xf32>
    %15 = arith.subf %14, %13 : vector<1x256xf32>
    %16 = math.exp %15 : vector<1x256xf32>
    %17 = vector.broadcast %13 : vector<1x256xf32> to vector<256x256xf32>
    %18 = arith.subf %9, %17 : vector<256x256xf32>
    %19 = math.exp %18 : vector<256x256xf32>
    %c0_12 = arith.constant 0 : index
    %c0_13 = arith.constant 0 : index
    %c0_14 = arith.constant 0 : index
    %20 = vector.load %arg5[%c0_12, %c0_13, %c0_14] : memref<1x8x256xf32, #tpu.memory_space<vmem>>, vector<1x8x256xf32>
    %21 = vector.shape_cast %20 : vector<1x8x256xf32> to vector<8x256xf32>
    %cst_15 = arith.constant dense<0.000000e+00> : vector<8x256xf32>
    %22 = tpu.matmul %21, %19, %cst_15 {dimension_numbers = #tpu.dot_dimension_numbers<[1], [0], [0], [1], [0, 0, 1, 1], [], []>} : vector<8x256xf32>, vector<256x256xf32>, vector<8x256xf32> -> vector<8x256xf32>
    %c0_16 = arith.constant 0 : index
    %c0_17 = arith.constant 0 : index
    %23 = vector.load %arg8[%c0_16, %c0_17] : memref<8x256xf32, #tpu.memory_space<vmem>>, vector<8x256xf32>
    %24 = vector.broadcast %16 : vector<1x256xf32> to vector<8x256xf32>
    %25 = arith.mulf %24, %23 : vector<8x256xf32>
    %26 = arith.addf %25, %22 : vector<8x256xf32>
    %c0_18 = arith.constant 0 : index
    %c0_19 = arith.constant 0 : index
    %27 = vector.load %arg8[%c0_18, %c0_19] : memref<8x256xf32, #tpu.memory_space<vmem>>, vector<8x256xf32>
    tpu.vector_store %arg8[%c0_18, %c0_19], %26 {strides = array<i32>} : memref<8x256xf32, #tpu.memory_space<vmem>>, vector<8x256xf32>,
    %c0_20 = arith.constant 0 : index
    %c0_21 = arith.constant 0 : index
    %28 = vector.load %arg7[%c0_20, %c0_21] : memref<1x256xf32, #tpu.memory_space<vmem>>, vector<1x256xf32>
    tpu.vector_store %arg7[%c0_20, %c0_21], %13 {strides = array<i32>} : memref<1x256xf32, #tpu.memory_space<vmem>>, vector<1x256xf32>,
    %c0_i32_22 = arith.constant 0 : i32
    %29 = arith.cmpi eq, %arg2, %c0_i32_22 : i32
    %30 = arith.extui %29 : i1 to i32
    %c0_i32_23 = arith.constant 0 : i32
    %31 = arith.cmpi ne, %30, %c0_i32_23 : i32
    scf.if %31 {
      %c0_24 = arith.constant 0 : index
      %c0_25 = arith.constant 0 : index
      %32 = vector.load %arg8[%c0_24, %c0_25] : memref<8x256xf32, #tpu.memory_space<vmem>>, vector<8x256xf32>
      %33 = vector.extract_strided_slice %32 {offsets = [2, 0], sizes = [1, 256], strides = [1, 1]} : vector<8x256xf32> to vector<1x256xf32>
      %34 = tpu.reciprocal %33 {approx = true} : vector<1x256xf32> -> vector<1x256xf32>
      %35 = arith.mulf %33, %34 : vector<1x256xf32>
      %cst_26 = arith.constant 2.000000e+00 : f32
      %36 = vector.broadcast %cst_26 : f32 to vector<1x256xf32>
      %37 = arith.subf %36, %35 : vector<1x256xf32>
      %38 = arith.mulf %34, %37 : vector<1x256xf32>
      %39 = vector.extract_strided_slice %32 {offsets = [0, 0], sizes = [2, 256], strides = [1, 1]} : vector<8x256xf32> to vector<2x256xf32>
      %40 = vector.broadcast %38 : vector<1x256xf32> to vector<2x256xf32>
      %41 = arith.mulf %39, %40 : vector<2x256xf32>
      %c0_27 = arith.constant 0 : index
      %c0_28 = arith.constant 0 : index
      %c0_29 = arith.constant 0 : index
      %42 = vector.load %arg6[%c0_27, %c0_28, %c0_29] : memref<1x2x256xf32, #tpu.memory_space<vmem>>, vector<1x2x256xf32>
      %43 = vector.shape_cast %42 : vector<1x2x256xf32> to vector<2x256xf32>
      %44 = vector.shape_cast %41 : vector<2x256xf32> to vector<1x2x256xf32>
      tpu.vector_store %arg6[%c0_27, %c0_28, %c0_29], %44 {strides = array<i32>} : memref<1x2x256xf32, #tpu.memory_space<vmem>>, vector<1x2x256xf32>,
    } else {
    }
    return
  }
  func.func @transform_0(%arg0: i32, %arg1: i32, %arg2: i32) -> (i32, i32, i32) {
    %c0_i32 = arith.constant 0 : i32
    %c0_i32_0 = arith.constant 0 : i32
    return %arg0, %arg1, %c0_i32 : i32, i32, i32
  }
  func.func @transform_1(%arg0: i32, %arg1: i32, %arg2: i32) -> (i32, i32, i32) {
    %c0_i32 = arith.constant 0 : i32
    %c0_i32_0 = arith.constant 0 : i32
    return %arg0, %arg2, %c0_i32 : i32, i32, i32
  }
  func.func @transform_2(%arg0: i32, %arg1: i32, %arg2: i32) -> (i32, i32, i32) {
    %c0_i32 = arith.constant 0 : i32
    %c0_i32_0 = arith.constant 0 : i32
    return %arg0, %c0_i32, %arg2 : i32, i32, i32
  }
  func.func @transform_3(%arg0: i32, %arg1: i32, %arg2: i32) -> (i32, i32, i32) {
    %c0_i32 = arith.constant 0 : i32
    %c0_i32_0 = arith.constant 0 : i32
    return %arg0, %c0_i32, %arg1 : i32, i32, i32
  }
}

</mosaic_0001>

<llo_original>
// kernel: tpu_custom_call.1
$region0: #{tpu_custom_call.1}
  #allocation0 [shape = 'u32[]', space=smem, size = 0x4, offset = 0x4, fixed_abs, tag = 'smem constant byte address 0x4 - core index']
  #allocation1 [shape = 'u32[144,128]{1,0:T(1,128)}', space=vmem, size = 0x12000, scoped, tag = 'internal scratch']
  #allocation2 [shape = 'f32[1,256]{1,0:T(1,128)}', space=vmem, size = 0x400, scoped, tag = 'scratch operand']
  #allocation3 [shape = 'f32[8,256]{1,0:T(8,128)}', space=vmem, size = 0x2000, scoped, tag = 'scratch operand']
  %s0 = inlined_call_operand.hbm [shape: f32[2,256,128], index: 0, kind: input, shape index: {}]
  %s1 = inlined_call_operand.hbm [shape: f32[2,256,128], index: 1, kind: input, shape index: {}]
  %s2 = inlined_call_operand.hbm [shape: f32[2,8,256], index: 2, kind: input, shape index: {}]
  %s3 = inlined_call_operand.hbm [shape: f32[2,2,256], index: 3, kind: output, shape index: {}]
  %s4 = sld [smem:[#allocation0]]
  $region65: #{tpu_custom_call.1} parent=0
    _
  %s6 = ssub.s32 1, %s4
  %s7 = scalar_select 0, %s6, %s4
  $region1: #{tpu_custom_call.1} parent=0
    #allocation4 [shape = 'u8[262144]{0}', space=vmem, size = 0x40000, scoped, tag = 'input window, operand 0']
    #allocation5 [shape = 's32[2]{0}', space=sflag, size = 0x8, scoped, tag = 'scoped memory for tpu_custom_call.1']
    #allocation6 [shape = 's32[2]{0}', space=sflag, size = 0x8, scoped, tag = 'scoped memory for tpu_custom_call.1']
    #allocation7 [shape = 'u8[262144]{0}', space=vmem, size = 0x40000, scoped, tag = 'input window, operand 1']
    #allocation8 [shape = 's32[2]{0}', space=sflag, size = 0x8, scoped, tag = 'scoped memory for tpu_custom_call.1']
    #allocation9 [shape = 'u8[16384]{0}', space=vmem, size = 0x4000, scoped, tag = 'input window, operand 2']
    #allocation10 [shape = 'u8[4096]{0}', space=vmem, size = 0x1000, scoped, tag = 'output window, operand 0']
    %8 = vsyncpa [#allocation5], 0
    %s9 = scalar_lea.sflag [#allocation5], 1
    %10 = vsyncpa %s9, 0
    %11 = vsyncpa [#allocation8], 0
    %s12 = scalar_lea.sflag [#allocation8], 1
    %13 = vsyncpa %s12, 0
    %14 = vsyncpa [#allocation6], 0
    %s15 = scalar_lea.sflag [#allocation6], 1
    %16 = vsyncpa %s15, 0
    loop: start=0, step=1, limit=4
    $region2: #{tpu_custom_call.1} parent=1 // loop_pre_header
      _
    $region3: #{tpu_custom_call.1} parent=1 // loop_header
      %s18 = sphi 0, %s22
      %p19 = scmp.ge.s32.totalorder %s18, 4
      %s25 = sphi 0, %s44
      %s26 = sphi 0, %s40
      %s27 = sphi 0, %s36
      %s28 = sphi 0, %s25
      %s29 = sphi 0, %s26
      %s30 = sphi 0, %s27
      %s31 = sphi 0, %s28
      %s32 = sphi 0, %s29
      %s33 = sphi 0, %s30
      %s49 = sphi 0, %s51
      %s52 = sphi 0, %s49
      %s53 = sphi 0, %s52
      %s69 = sphi 0, %s53
      %s77 = sphi 0, %s79
      %s80 = sphi 0, %s77
      %s81 = sphi 0, %s80
      %s97 = sphi 0, %s81
      %s105 = sphi 0, %s107
      %s108 = sphi 0, %s105
      %s109 = sphi 0, %s108
      %s125 = sphi 0, %s109
      %s133 = sphi 0, %s135
      %s136 = sphi 0, %s133
      %s137 = sphi 0, %s136
      %s153 = sphi 0, %s137
    $region4: #{tpu_custom_call.1} parent=1 // loop_header_branch
      %21 = sbr.rel (%p19) target = $region8
    $region5: #{tpu_custom_call.1} parent=1 // loop_body
      %s23 = ssub.s32 %s18, 1
      %s24 = ssub.s32 %s18, 2
      %s34 = sadd.s32 1, %s27
      %p35 = scmp.ge.s32.totalorder %s34, 1
      %s36 = scalar_select %p35, 0, %s34
      %s37 = sadd.s32 1, %s26
      %s38 = scalar_select %p35, %s37, %s26
      %p39 = scmp.ge.s32.totalorder %s38, 1
      %s40 = scalar_select %p39, 0, %s38
      %s41 = sadd.s32 1, %s25
      %s42 = scalar_select %p39, %s41, %s25
      %p43 = scmp.ge.s32.totalorder %s42, 2
      %s44 = scalar_select %p43, 0, %s42
      %s45 = ssub.s32 %s25, %s44
      %s46 = ssub.s32 %s26, %s40
      %s47 = sor.u32 %s45, %s46
      %p48 = scmp.eq.s32.totalorder %s47, 0
      %s50 = sadd.s32 %s49, 1
      %s51 = scalar_select %p48, %s49, %s50
      %p54 = pneg %p48
      %p55 = scmp.eq.s32.totalorder %s18, 1
      %p56 = por %p54, %p55
      %p57 = scmp.ne.s32.totalorder %s49, %s52
      %p58 = scmp.eq.s32.totalorder %s18, 0
      %p59 = por %p57, %p58
      %p60 = scmp.ne.s32.totalorder %s49, %s52
      %p61 = scmp.eq.s32.totalorder %s23, 1
      %p62 = por %p60, %p61
      %p63 = scmp.ne.s32.totalorder %s52, %s53
      %p64 = scmp.eq.s32.totalorder %s23, 0
      %p65 = por %p63, %p64
      %p66 = scmp.ne.s32.totalorder %s52, %s53
      %p67 = scmp.eq.s32.totalorder %s24, 1
      %p68 = por %p66, %p67
      %p70 = scmp.ne.s32.totalorder %s53, %s69
      %p71 = scmp.eq.s32.totalorder %s24, 0
      %p72 = por %p70, %p71
      %s73 = ssub.s32 %s25, %s44
      %s74 = ssub.s32 %s27, %s36
      %s75 = sor.u32 %s73, %s74
      %p76 = scmp.eq.s32.totalorder %s75, 0
      %s78 = sadd.s32 %s77, 1
      %s79 = scalar_select %p76, %s77, %s78
      %p82 = pneg %p76
      %p83 = scmp.eq.s32.totalorder %s18, 1
      %p84 = por %p82, %p83
      %p85 = scmp.ne.s32.totalorder %s77, %s80
      %p86 = scmp.eq.s32.totalorder %s18, 0
      %p87 = por %p85, %p86
      %p88 = scmp.ne.s32.totalorder %s77, %s80
      %p89 = scmp.eq.s32.totalorder %s23, 1
      %p90 = por %p88, %p89
      %p91 = scmp.ne.s32.totalorder %s80, %s81
      %p92 = scmp.eq.s32.totalorder %s23, 0
      %p93 = por %p91, %p92
      %p94 = scmp.ne.s32.totalorder %s80, %s81
      %p95 = scmp.eq.s32.totalorder %s24, 1
      %p96 = por %p94, %p95
      %p98 = scmp.ne.s32.totalorder %s81, %s97
      %p99 = scmp.eq.s32.totalorder %s24, 0
      %p100 = por %p98, %p99
      %s101 = ssub.s32 %s25, %s44
      %s102 = ssub.s32 %s27, %s36
      %s103 = sor.u32 %s101, %s102
      %p104 = scmp.eq.s32.totalorder %s103, 0
      %s106 = sadd.s32 %s105, 1
      %s107 = scalar_select %p104, %s105, %s106
      %p110 = pneg %p104
      %p111 = scmp.eq.s32.totalorder %s18, 1
      %p112 = por %p110, %p111
      %p113 = scmp.ne.s32.totalorder %s105, %s108
      %p114 = scmp.eq.s32.totalorder %s18, 0
      %p115 = por %p113, %p114
      %p116 = scmp.ne.s32.totalorder %s105, %s108
      %p117 = scmp.eq.s32.totalorder %s23, 1
      %p118 = por %p116, %p117
      %p119 = scmp.ne.s32.totalorder %s108, %s109
      %p120 = scmp.eq.s32.totalorder %s23, 0
      %p121 = por %p119, %p120
      %p122 = scmp.ne.s32.totalorder %s108, %s109
      %p123 = scmp.eq.s32.totalorder %s24, 1
      %p124 = por %p122, %p123
      %p126 = scmp.ne.s32.totalorder %s109, %s125
      %p127 = scmp.eq.s32.totalorder %s24, 0
      %p128 = por %p126, %p127
      %s129 = ssub.s32 %s25, %s44
      %s130 = ssub.s32 %s26, %s40
      %s131 = sor.u32 %s129, %s130
      %p132 = scmp.eq.s32.totalorder %s131, 0
      %s134 = sadd.s32 %s133, 1
      %s135 = scalar_select %p132, %s133, %s134
      %p138 = pneg %p132
      %p139 = scmp.eq.s32.totalorder %s18, 1
      %p140 = por %p138, %p139
      %p141 = scmp.ne.s32.totalorder %s133, %s136
      %p142 = scmp.eq.s32.totalorder %s18, 0
      %p143 = por %p141, %p142
      %p144 = scmp.ne.s32.totalorder %s133, %s136
      %p145 = scmp.eq.s32.totalorder %s23, 1
      %p146 = por %p144, %p145
      %p147 = scmp.ne.s32.totalorder %s136, %s137
      %p148 = scmp.eq.s32.totalorder %s23, 0
      %p149 = por %p147, %p148
      %p150 = scmp.ne.s32.totalorder %s136, %s137
      %p151 = scmp.eq.s32.totalorder %s24, 1
      %p152 = por %p150, %p151
      %p154 = scmp.ne.s32.totalorder %s137, %s153
      %p155 = scmp.eq.s32.totalorder %s24, 0
      %p156 = por %p154, %p155
      %p157 = scmp.le.s32.totalorder 1, %s18
      %p158 = scmp.lt.s32.totalorder %s18, 3
      %p159 = pnand %p157, %p158
      %p160 = pneg %p159
      // Predicated region
      $region9: #{tpu_custom_call.1} parent=5 // pred_check
        _
      $region10: #{tpu_custom_call.1} parent=5 // pred_check_branch
        %162 = sbr.rel (%p159) target = $region12
      $region11: #{tpu_custom_call.1} parent=5 // pred_region
        %s163 = ssub.s32 %s18, 1
      $region12: #{tpu_custom_call.1} parent=5 // pred_fallthru
        _
      %p164 = scmp.lt.s32.totalorder %s18, 2
      // Predicated region
      $region13: #{tpu_custom_call.1} parent=5 // pred_check
        %p165 = pneg %p164
      $region14: #{tpu_custom_call.1} parent=5 // pred_check_branch
        %167 = sbr.rel (%p165) target = $region16
      $region15: #{tpu_custom_call.1} parent=5 // pred_region
        // Predicated region
        $region17: #{tpu_custom_call.1} parent=15 // pred_check
          %p168 = pneg %p59
        $region18: #{tpu_custom_call.1} parent=15 // pred_check_branch
          %170 = sbr.rel (%p168) target = $region20
        $region19: #{tpu_custom_call.1} parent=15 // pred_region
          %s171 = sand.u32 %s49, 1
          %s172 = scalar_lea.sflag [#allocation5], %s171
          %s173 = sand.u32 %s49, 1
          %s174 = smul.addr %s173, 256
          %s175 = scalar_lea.vmem [#allocation4], %s174
          %s176 = smul.u32 32, %s26
          %s178 = ssub.s32 4096, 4096
          %179 = vsyncadd %s172, %s178
          %s180 = smul.addr %s25, 32
          %s181 = sadd.s32 %s176, %s180
          %s182 = smul.addr %s181, 128
          %s183 = scalar_lea.hbm %s0, %s182
          %s184 = sshll.u32 %s175, 4
          %s185 = int_to_ptr.vmem [resolvable:$true] %s184
          %190 = dma.hbm_to_vmem [thread:$0]  %s183, 4096, %s185, %s172, 128, 128, 8
        $region20: #{tpu_custom_call.1} parent=15 // pred_fallthru
          _
        // Predicated region
        $region21: #{tpu_custom_call.1} parent=15 // pred_check
          %p191 = pneg %p87
        $region22: #{tpu_custom_call.1} parent=15 // pred_check_branch
          %193 = sbr.rel (%p191) target = $region24
        $region23: #{tpu_custom_call.1} parent=15 // pred_region
          %s194 = sand.u32 %s18, 1
          %s195 = scalar_lea.sflag [#allocation8], %s194
          %s196 = sand.u32 %s77, 1
          %s197 = smul.addr %s196, 256
          %s198 = scalar_lea.vmem [#allocation7], %s197
          %s199 = smul.u32 32, %s27
          %s201 = ssub.s32 4096, 4096
          %202 = vsyncadd %s195, %s201
          %s203 = smul.addr %s25, 32
          %s204 = sadd.s32 %s199, %s203
          %s205 = smul.addr %s204, 128
          %s206 = scalar_lea.hbm %s1, %s205
          %s207 = sshll.u32 %s198, 4
          %s208 = int_to_ptr.vmem [resolvable:$true] %s207
          %213 = dma.hbm_to_vmem [thread:$0]  %s206, 4096, %s208, %s195, 128, 128, 8
        $region24: #{tpu_custom_call.1} parent=15 // pred_fallthru
          _
        // Predicated region
        $region25: #{tpu_custom_call.1} parent=15 // pred_check
          %p214 = pneg %p115
        $region26: #{tpu_custom_call.1} parent=15 // pred_check_branch
          %216 = sbr.rel (%p214) target = $region28
        $region27: #{tpu_custom_call.1} parent=15 // pred_region
          %s217 = sand.u32 %s18, 1
          %s218 = scalar_lea.sflag [#allocation8], %s217
          %s219 = sand.u32 %s105, 1
          %s220 = smul.addr %s219, 16
          %s221 = scalar_lea.vmem [#allocation9], %s220
          %s222 = smul.u32 2, %s27
          %s224 = ssub.s32 256, 256
          %225 = vsyncadd %s218, %s224
          %s226 = smul.addr %s25, 2
          %s227 = sadd.s32 %s222, %s226
          %s228 = smul.addr %s227, 128
          %s229 = scalar_lea.hbm %s2, %s228
          %s231 = sshll.u32 %s221, 4
          %s232 = int_to_ptr.vmem [resolvable:$true] %s231
          %234 = dma.hbm_to_vmem [thread:$0]  %s229, 256, %s232, %s218
        $region28: #{tpu_custom_call.1} parent=15 // pred_fallthru
          _
      $region16: #{tpu_custom_call.1} parent=5 // pred_fallthru
        _
      %p235 = scmp.le.s32.totalorder 1, %s18
      %p236 = scmp.lt.s32.totalorder %s18, 3
      %p237 = pnand %p235, %p236
      %p238 = pneg %p237
      // Predicated region
      $region29: #{tpu_custom_call.1} parent=5 // pred_check
        _
      $region30: #{tpu_custom_call.1} parent=5 // pred_check_branch
        %240 = sbr.rel (%p237) target = $region32
      $region31: #{tpu_custom_call.1} parent=5 // pred_region
        %s241 = ssub.s32 %s18, 1
        %s242 = sand.u32 %s52, 1
        %s243 = scalar_lea.sflag [#allocation5], %s242
        %s244 = sand.u32 %s52, 1
        %s245 = smul.addr %s244, 256
        %s246 = scalar_lea.vmem [#allocation4], %s245
        // Predicated region
        $region33: #{tpu_custom_call.1} parent=31 // pred_check
          %p247 = pneg %p65
        $region34: #{tpu_custom_call.1} parent=31 // pred_check_branch
          %249 = sbr.rel (%p247) target = $region36
        $region35: #{tpu_custom_call.1} parent=31 // pred_region
          %250 = dma.done %s243, 4096
        $region36: #{tpu_custom_call.1} parent=31 // pred_fallthru
          _
        %s251 = sand.u32 %s23, 1
        %s252 = scalar_lea.sflag [#allocation8], %s251
        %s253 = sand.u32 %s80, 1
        %s254 = smul.addr %s253, 256
        %s255 = scalar_lea.vmem [#allocation7], %s254
        // Predicated region
        $region37: #{tpu_custom_call.1} parent=31 // pred_check
          %p256 = pneg %p93
        $region38: #{tpu_custom_call.1} parent=31 // pred_check_branch
          %258 = sbr.rel (%p256) target = $region40
        $region39: #{tpu_custom_call.1} parent=31 // pred_region
          %259 = dma.done %s252, 4096
        $region40: #{tpu_custom_call.1} parent=31 // pred_fallthru
          _
        %s260 = sand.u32 %s23, 1
        %s261 = scalar_lea.sflag [#allocation8], %s260
        %s262 = sand.u32 %s108, 1
        %s263 = smul.addr %s262, 16
        %s264 = scalar_lea.vmem [#allocation9], %s263
        // Predicated region
        $region41: #{tpu_custom_call.1} parent=31 // pred_check
          %p265 = pneg %p121
        $region42: #{tpu_custom_call.1} parent=31 // pred_check_branch
          %267 = sbr.rel (%p265) target = $region44
        $region43: #{tpu_custom_call.1} parent=31 // pred_region
          %268 = dma.done %s261, 256
        $region44: #{tpu_custom_call.1} parent=31 // pred_fallthru
          _
        %s269 = sand.u32 %s52, 1
        %s270 = scalar_lea.sflag [#allocation5], %s269
        %s271 = sand.u32 %s52, 1
        %s272 = smul.addr %s271, 256
        %s273 = scalar_lea.vmem [#allocation4], %s272
        %p274 = pneg %p65
        %p275 = pneg %p62
        %s276 = sand.u32 %s23, 1
        %s277 = scalar_lea.sflag [#allocation8], %s276
        %s278 = sand.u32 %s80, 1
        %s279 = smul.addr %s278, 256
        %s280 = scalar_lea.vmem [#allocation7], %s279
        %p281 = pneg %p93
        %p282 = pneg %p90
        %s283 = sand.u32 %s23, 1
        %s284 = scalar_lea.sflag [#allocation8], %s283
        %s285 = sand.u32 %s108, 1
        %s286 = smul.addr %s285, 16
        %s287 = scalar_lea.vmem [#allocation9], %s286
        %p288 = pneg %p121
        %p289 = pneg %p118
        %p290 = pneg %p149
        %p291 = pneg %p146
        %s292 = sand.u32 %s136, 1
        %s293 = scalar_lea.sflag [#allocation6], %s292
        %s294 = sand.u32 %s136, 1
        %s295 = smul.addr %s294, 4
        %s296 = scalar_lea.vmem [#allocation10], %s295
        %s297 = smul.u32 32, %s29
        %s298 = smul.u32 32, %s30
        %s299 = smul.u32 2, %s30
        %s300 = smul.u32 2, %s29
        %p301 = scmp.eq.s32.totalorder %s30, 0
        // Predicated region
        $region45: #{tpu_custom_call.1} parent=31 // pred_check
          %p302 = pneg %p301
        $region46: #{tpu_custom_call.1} parent=31 // pred_check_branch
          %304 = sbr.rel (%p302) target = $region48
        $region47: #{tpu_custom_call.1} parent=31 // pred_region
          %v305 = vlaneseq
          %vm306 = vcmp.ge.s32.totalorder %v305, 0
          %vm307 = vcmp.lt.s32.totalorder %v305, 256
          %vm308 = vmand %vm306, %vm307
          %309 = vst.msk [vmem:[#allocation2] sm:$0x3] %vm308, -inf
          %310 = vst [vmem:[#allocation3] sm:$0xff] 0.0
          %311 = vst [vmem:[#allocation3 + $0x8] sm:$0xff] 0.0
        $region48: #{tpu_custom_call.1} parent=31 // pred_fallthru
          _
        %v312 = vld [vmem:[%s255] sm:$0xff]
        %v313 = vld [vmem:[%s255 + $0x8] sm:$0xff]
        %v314 = vld [vmem:[%s255 + $0x10] sm:$0xff]
        %v315 = vld [vmem:[%s255 + $0x18] sm:$0xff]
        %v316 = vld [vmem:[%s255 + $0x20] sm:$0xff]
        %v317 = vld [vmem:[%s255 + $0x28] sm:$0xff]
        %v318 = vld [vmem:[%s255 + $0x30] sm:$0xff]
        %v319 = vld [vmem:[%s255 + $0x38] sm:$0xff]
        %v320 = vld [vmem:[%s255 + $0x40] sm:$0xff]
        %v321 = vld [vmem:[%s255 + $0x48] sm:$0xff]
        %v322 = vld [vmem:[%s255 + $0x50] sm:$0xff]
        %v323 = vld [vmem:[%s255 + $0x58] sm:$0xff]
        %v324 = vld [vmem:[%s255 + $0x60] sm:$0xff]
        %v325 = vld [vmem:[%s255 + $0x68] sm:$0xff]
        %v326 = vld [vmem:[%s255 + $0x70] sm:$0xff]
        %v327 = vld [vmem:[%s255 + $0x78] sm:$0xff]
        %v328 = vld [vmem:[%s255 + $0x80] sm:$0xff]
        %v329 = vld [vmem:[%s255 + $0x88] sm:$0xff]
        %v330 = vld [vmem:[%s255 + $0x90] sm:$0xff]
        %v331 = vld [vmem:[%s255 + $0x98] sm:$0xff]
        %v332 = vld [vmem:[%s255 + $0xa0] sm:$0xff]
        %v333 = vld [vmem:[%s255 + $0xa8] sm:$0xff]
        %v334 = vld [vmem:[%s255 + $0xb0] sm:$0xff]
        %v335 = vld [vmem:[%s255 + $0xb8] sm:$0xff]
        %v336 = vld [vmem:[%s255 + $0xc0] sm:$0xff]
        %v337 = vld [vmem:[%s255 + $0xc8] sm:$0xff]
        %v338 = vld [vmem:[%s255 + $0xd0] sm:$0xff]
        %v339 = vld [vmem:[%s255 + $0xd8] sm:$0xff]
        %v340 = vld [vmem:[%s255 + $0xe0] sm:$0xff]
        %v341 = vld [vmem:[%s255 + $0xe8] sm:$0xff]
        %v342 = vld [vmem:[%s255 + $0xf0] sm:$0xff]
        %v343 = vld [vmem:[%s255 + $0xf8] sm:$0xff]
        %v344 = vld [vmem:[%s246] sm:$0xff]
        %v345 = vld [vmem:[%s246 + $0x8] sm:$0xff]
        %v346 = vld [vmem:[%s246 + $0x10] sm:$0xff]
        %v347 = vld [vmem:[%s246 + $0x18] sm:$0xff]
        %v348 = vld [vmem:[%s246 + $0x20] sm:$0xff]
        %v349 = vld [vmem:[%s246 + $0x28] sm:$0xff]
        %v350 = vld [vmem:[%s246 + $0x30] sm:$0xff]
        %v351 = vld [vmem:[%s246 + $0x38] sm:$0xff]
        %v352 = vld [vmem:[%s246 + $0x40] sm:$0xff]
        %v353 = vld [vmem:[%s246 + $0x48] sm:$0xff]
        %v354 = vld [vmem:[%s246 + $0x50] sm:$0xff]
        %v355 = vld [vmem:[%s246 + $0x58] sm:$0xff]
        %v356 = vld [vmem:[%s246 + $0x60] sm:$0xff]
        %v357 = vld [vmem:[%s246 + $0x68] sm:$0xff]
        %v358 = vld [vmem:[%s246 + $0x70] sm:$0xff]
        %v359 = vld [vmem:[%s246 + $0x78] sm:$0xff]
        %v360 = vld [vmem:[%s246 + $0x80] sm:$0xff]
        %v361 = vld [vmem:[%s246 + $0x88] sm:$0xff]
        %v362 = vld [vmem:[%s246 + $0x90] sm:$0xff]
        %v363 = vld [vmem:[%s246 + $0x98] sm:$0xff]
        %v364 = vld [vmem:[%s246 + $0xa0] sm:$0xff]
        %v365 = vld [vmem:[%s246 + $0xa8] sm:$0xff]
        %v366 = vld [vmem:[%s246 + $0xb0] sm:$0xff]
        %v367 = vld [vmem:[%s246 + $0xb8] sm:$0xff]
        %v368 = vld [vmem:[%s246 + $0xc0] sm:$0xff]
        %v369 = vld [vmem:[%s246 + $0xc8] sm:$0xff]
        %v370 = vld [vmem:[%s246 + $0xd0] sm:$0xff]
        %v371 = vld [vmem:[%s246 + $0xd8] sm:$0xff]
        %v372 = vld [vmem:[%s246 + $0xe0] sm:$0xff]
        %v373 = vld [vmem:[%s246 + $0xe8] sm:$0xff]
        %v374 = vld [vmem:[%s246 + $0xf0] sm:$0xff]
        %v375 = vld [vmem:[%s246 + $0xf8] sm:$0xff]
        %376 = vmatprep.subr.mxu0 0.0
        %377 = vmatpush1.xpose.msra.mxu0 %v359
        %378 = vmatprep.subr.mxu0 0.0
        %379 = vmatpush1.xpose.msra.mxu0 %v358
        %380 = vmatprep.subr.mxu0 0.0
        %381 = vmatpush1.xpose.msra.mxu0 %v357
        %382 = vmatprep.subr.mxu0 0.0
        %383 = vmatpush1.xpose.msra.mxu0 %v356
        %384 = vmatprep.subr.mxu0 0.0
        %385 = vmatpush1.xpose.msra.mxu0 %v355
        %386 = vmatprep.subr.mxu0 0.0
        %387 = vmatpush1.xpose.msra.mxu0 %v354
        %388 = vmatprep.subr.mxu0 0.0
        %389 = vmatpush1.xpose.msra.mxu0 %v353
        %390 = vmatprep.subr.mxu0 0.0
        %391 = vmatpush1.xpose.msra.mxu0 %v352
        %392 = vmatprep.subr.mxu0 0.0
        %393 = vmatpush1.xpose.msra.mxu0 %v351
        %394 = vmatprep.subr.mxu0 0.0
        %395 = vmatpush1.xpose.msra.mxu0 %v350
        %396 = vmatprep.subr.mxu0 0.0
        %397 = vmatpush1.xpose.msra.mxu0 %v349
        %398 = vmatprep.subr.mxu0 0.0
        %399 = vmatpush1.xpose.msra.mxu0 %v348
        %400 = vmatprep.subr.mxu0 0.0
        %401 = vmatpush1.xpose.msra.mxu0 %v347
        %402 = vmatprep.subr.mxu0 0.0
        %403 = vmatpush1.xpose.msra.mxu0 %v346
        %404 = vmatprep.subr.mxu0 0.0
        %405 = vmatpush1.xpose.msra.mxu0 %v345
        %406 = vmatprep.subr.mxu0 0.0
        %407 = vmatpush1.xpose.msra.mxu0 %v344
        %408 = vmatprep.subr.mxu0 0.0
        %409 = vmatpush2.xpose.msra.mxu0 %v375
        %410 = vmatprep.subr.mxu0 0.0
        %411 = vmatpush2.xpose.msra.mxu0 %v374
        %412 = vmatprep.subr.mxu0 0.0
        %413 = vmatpush2.xpose.msra.mxu0 %v373
        %414 = vmatprep.subr.mxu0 0.0
        %415 = vmatpush2.xpose.msra.mxu0 %v372
        %416 = vmatprep.subr.mxu0 0.0
        %417 = vmatpush2.xpose.msra.mxu0 %v371
        %418 = vmatprep.subr.mxu0 0.0
        %419 = vmatpush2.xpose.msra.mxu0 %v370
        %420 = vmatprep.subr.mxu0 0.0
        %421 = vmatpush2.xpose.msra.mxu0 %v369
        %422 = vmatprep.subr.mxu0 0.0
        %423 = vmatpush2.xpose.msra.mxu0 %v368
        %424 = vmatprep.subr.mxu0 0.0
        %425 = vmatpush2.xpose.msra.mxu0 %v367
        %426 = vmatprep.subr.mxu0 0.0
        %427 = vmatpush2.xpose.msra.mxu0 %v366
        %428 = vmatprep.subr.mxu0 0.0
        %429 = vmatpush2.xpose.msra.mxu0 %v365
        %430 = vmatprep.subr.mxu0 0.0
        %431 = vmatpush2.xpose.msra.mxu0 %v364
        %432 = vmatprep.subr.mxu0 0.0
        %433 = vmatpush2.xpose.msra.mxu0 %v363
        %434 = vmatprep.subr.mxu0 0.0
        %435 = vmatpush2.xpose.msra.mxu0 %v362
        %436 = vmatprep.subr.mxu0 0.0
        %437 = vmatpush2.xpose.msra.mxu0 %v361
        %438 = vmatprep.subr.mxu0 0.0
        %439 = vmatpush2.xpose.msra.mxu0 %v360
        %440 = vmatprep.mubr.f32.mxu0 0.0
        %441 = vmatmul.mubr.f32.gmra.mxu0 %v312
        %v442 = vpop.f32.mrf.mxu0
        %v443 = vadd.f32 0.0, %v442
        %v444 = vpop.f32.mrf.mxu0
        %v445 = vadd.f32 0.0, %v444
        %446 = vmatprep.mubr.f32.mxu0 0.0
        %447 = vmatmul.mubr.f32.gmra.mxu0 %v313
        %v448 = vpop.f32.mrf.mxu0
        %v449 = vadd.f32 0.0, %v448
        %v450 = vpop.f32.mrf.mxu0
        %v451 = vadd.f32 0.0, %v450
        %452 = vmatprep.mubr.f32.mxu0 0.0
        %453 = vmatmul.mubr.f32.gmra.mxu0 %v314
        %v454 = vpop.f32.mrf.mxu0
        %v455 = vadd.f32 0.0, %v454
        %v456 = vpop.f32.mrf.mxu0
        %v457 = vadd.f32 0.0, %v456
        %458 = vmatprep.mubr.f32.mxu0 0.0
        %459 = vmatmul.mubr.f32.gmra.mxu0 %v315
        %v460 = vpop.f32.mrf.mxu0
        %v461 = vadd.f32 0.0, %v460
        %v462 = vpop.f32.mrf.mxu0
        %v463 = vadd.f32 0.0, %v462
        %464 = vmatprep.mubr.f32.mxu0 0.0
        %465 = vmatmul.mubr.f32.gmra.mxu0 %v316
        %v466 = vpop.f32.mrf.mxu0
        %v467 = vadd.f32 0.0, %v466
        %v468 = vpop.f32.mrf.mxu0
        %v469 = vadd.f32 0.0, %v468
        %470 = vmatprep.mubr.f32.mxu0 0.0
        %471 = vmatmul.mubr.f32.gmra.mxu0 %v317
        %v472 = vpop.f32.mrf.mxu0
        %v473 = vadd.f32 0.0, %v472
        %v474 = vpop.f32.mrf.mxu0
        %v475 = vadd.f32 0.0, %v474
        %476 = vmatprep.mubr.f32.mxu0 0.0
        %477 = vmatmul.mubr.f32.gmra.mxu0 %v318
        %v478 = vpop.f32.mrf.mxu0
        %v479 = vadd.f32 0.0, %v478
        %v480 = vpop.f32.mrf.mxu0
        %v481 = vadd.f32 0.0, %v480
        %482 = vmatprep.mubr.f32.mxu0 0.0
        %483 = vmatmul.mubr.f32.gmra.mxu0 %v319
        %v484 = vpop.f32.mrf.mxu0
        %v485 = vadd.f32 0.0, %v484
        %v486 = vpop.f32.mrf.mxu0
        %v487 = vadd.f32 0.0, %v486
        %488 = vmatprep.mubr.f32.mxu0 0.0
        %489 = vmatmul.mubr.f32.gmra.mxu0 %v320
        %v490 = vpop.f32.mrf.mxu0
        %v491 = vadd.f32 0.0, %v490
        %v492 = vpop.f32.mrf.mxu0
        %v493 = vadd.f32 0.0, %v492
        %494 = vmatprep.mubr.f32.mxu0 0.0
        %495 = vmatmul.mubr.f32.gmra.mxu0 %v321
        %v496 = vpop.f32.mrf.mxu0
        %v497 = vadd.f32 0.0, %v496
        %v498 = vpop.f32.mrf.mxu0
        %v499 = vadd.f32 0.0, %v498
        %500 = vmatprep.mubr.f32.mxu0 0.0
        %501 = vmatmul.mubr.f32.gmra.mxu0 %v322
        %v502 = vpop.f32.mrf.mxu0
        %v503 = vadd.f32 0.0, %v502
        %v504 = vpop.f32.mrf.mxu0
        %v505 = vadd.f32 0.0, %v504
        %506 = vmatprep.mubr.f32.mxu0 0.0
        %507 = vmatmul.mubr.f32.gmra.mxu0 %v323
        %v508 = vpop.f32.mrf.mxu0
        %v509 = vadd.f32 0.0, %v508
        %v510 = vpop.f32.mrf.mxu0
        %v511 = vadd.f32 0.0, %v510
        %512 = vmatprep.mubr.f32.mxu0 0.0
        %513 = vmatmul.mubr.f32.gmra.mxu0 %v324
        %v514 = vpop.f32.mrf.mxu0
        %v515 = vadd.f32 0.0, %v514
        %v516 = vpop.f32.mrf.mxu0
        %v517 = vadd.f32 0.0, %v516
        %518 = vmatprep.mubr.f32.mxu0 0.0
        %519 = vmatmul.mubr.f32.gmra.mxu0 %v325
        %v520 = vpop.f32.mrf.mxu0
        %v521 = vadd.f32 0.0, %v520
        %v522 = vpop.f32.mrf.mxu0
        %v523 = vadd.f32 0.0, %v522
        %524 = vmatprep.mubr.f32.mxu0 0.0
        %525 = vmatmul.mubr.f32.gmra.mxu0 %v326
        %v526 = vpop.f32.mrf.mxu0
        %v527 = vadd.f32 0.0, %v526
        %v528 = vpop.f32.mrf.mxu0
        %v529 = vadd.f32 0.0, %v528
        %530 = vmatprep.mubr.f32.mxu0 0.0
        %531 = vmatmul.mubr.f32.gmra.mxu0 %v327
        %v532 = vpop.f32.mrf.mxu0
        %v533 = vadd.f32 0.0, %v532
        %v534 = vpop.f32.mrf.mxu0
        %v535 = vadd.f32 0.0, %v534
        %536 = vmatprep.mubr.f32.mxu0 0.0
        %537 = vmatmul.mubr.f32.gmra.mxu0 %v328
        %v538 = vpop.f32.mrf.mxu0
        %v539 = vadd.f32 0.0, %v538
        %v540 = vpop.f32.mrf.mxu0
        %v541 = vadd.f32 0.0, %v540
        %542 = vmatprep.mubr.f32.mxu0 0.0
        %543 = vmatmul.mubr.f32.gmra.mxu0 %v329
        %v544 = vpop.f32.mrf.mxu0
        %v545 = vadd.f32 0.0, %v544
        %v546 = vpop.f32.mrf.mxu0
        %v547 = vadd.f32 0.0, %v546
        %548 = vmatprep.mubr.f32.mxu0 0.0
        %549 = vmatmul.mubr.f32.gmra.mxu0 %v330
        %v550 = vpop.f32.mrf.mxu0
        %v551 = vadd.f32 0.0, %v550
        %v552 = vpop.f32.mrf.mxu0
        %v553 = vadd.f32 0.0, %v552
        %554 = vmatprep.mubr.f32.mxu0 0.0
        %555 = vmatmul.mubr.f32.gmra.mxu0 %v331
        %v556 = vpop.f32.mrf.mxu0
        %v557 = vadd.f32 0.0, %v556
        %v558 = vpop.f32.mrf.mxu0
        %v559 = vadd.f32 0.0, %v558
        %560 = vmatprep.mubr.f32.mxu0 0.0
        %561 = vmatmul.mubr.f32.gmra.mxu0 %v332
        %v562 = vpop.f32.mrf.mxu0
        %v563 = vadd.f32 0.0, %v562
        %v564 = vpop.f32.mrf.mxu0
        %v565 = vadd.f32 0.0, %v564
        %566 = vmatprep.mubr.f32.mxu0 0.0
        %567 = vmatmul.mubr.f32.gmra.mxu0 %v333
        %v568 = vpop.f32.mrf.mxu0
        %v569 = vadd.f32 0.0, %v568
        %v570 = vpop.f32.mrf.mxu0
        %v571 = vadd.f32 0.0, %v570
        %572 = vmatprep.mubr.f32.mxu0 0.0
        %573 = vmatmul.mubr.f32.gmra.mxu0 %v334
        %v574 = vpop.f32.mrf.mxu0
        %v575 = vadd.f32 0.0, %v574
        %v576 = vpop.f32.mrf.mxu0
        %v577 = vadd.f32 0.0, %v576
        %578 = vmatprep.mubr.f32.mxu0 0.0
        %579 = vmatmul.mubr.f32.gmra.mxu0 %v335
        %v580 = vpop.f32.mrf.mxu0
        %v581 = vadd.f32 0.0, %v580
        %v582 = vpop.f32.mrf.mxu0
        %v583 = vadd.f32 0.0, %v582
        %584 = vmatprep.mubr.f32.mxu0 0.0
        %585 = vmatmul.mubr.f32.gmra.mxu0 %v336
        %v586 = vpop.f32.mrf.mxu0
        %v587 = vadd.f32 0.0, %v586
        %v588 = vpop.f32.mrf.mxu0
        %v589 = vadd.f32 0.0, %v588
        %590 = vmatprep.mubr.f32.mxu0 0.0
        %591 = vmatmul.mubr.f32.gmra.mxu0 %v337
        %v592 = vpop.f32.mrf.mxu0
        %v593 = vadd.f32 0.0, %v592
        %v594 = vpop.f32.mrf.mxu0
        %v595 = vadd.f32 0.0, %v594
        %596 = vmatprep.mubr.f32.mxu0 0.0
        %597 = vmatmul.mubr.f32.gmra.mxu0 %v338
        %v598 = vpop.f32.mrf.mxu0
        %v599 = vadd.f32 0.0, %v598
        %v600 = vpop.f32.mrf.mxu0
        %v601 = vadd.f32 0.0, %v600
        %602 = vmatprep.mubr.f32.mxu0 0.0
        %603 = vmatmul.mubr.f32.gmra.mxu0 %v339
        %v604 = vpop.f32.mrf.mxu0
        %v605 = vadd.f32 0.0, %v604
        %v606 = vpop.f32.mrf.mxu0
        %v607 = vadd.f32 0.0, %v606
        %608 = vmatprep.mubr.f32.mxu0 0.0
        %609 = vmatmul.mubr.f32.gmra.mxu0 %v340
        %v610 = vpop.f32.mrf.mxu0
        %v611 = vadd.f32 0.0, %v610
        %v612 = vpop.f32.mrf.mxu0
        %v613 = vadd.f32 0.0, %v612
        %614 = vmatprep.mubr.f32.mxu0 0.0
        %615 = vmatmul.mubr.f32.gmra.mxu0 %v341
        %v616 = vpop.f32.mrf.mxu0
        %v617 = vadd.f32 0.0, %v616
        %v618 = vpop.f32.mrf.mxu0
        %v619 = vadd.f32 0.0, %v618
        %620 = vmatprep.mubr.f32.mxu0 0.0
        %621 = vmatmul.mubr.f32.gmra.mxu0 %v342
        %v622 = vpop.f32.mrf.mxu0
        %v623 = vadd.f32 0.0, %v622
        %v624 = vpop.f32.mrf.mxu0
        %v625 = vadd.f32 0.0, %v624
        %626 = vmatprep.mubr.f32.mxu0 0.0
        %627 = vmatmul.mubr.f32.gmra.mxu0 %v343
        %v628 = vpop.f32.mrf.mxu0
        %v629 = vadd.f32 0.0, %v628
        %v630 = vpop.f32.mrf.mxu0
        %v631 = vadd.f32 0.0, %v630
        %632 = vdwg.mxu0
        %v633 = vmul.f32 %v443, 10.0
        %v634 = vmul.f32 %v445, 10.0
        %v635 = vmul.f32 %v449, 10.0
        %v636 = vmul.f32 %v451, 10.0
        %v637 = vmul.f32 %v455, 10.0
        %v638 = vmul.f32 %v457, 10.0
        %v639 = vmul.f32 %v461, 10.0
        %v640 = vmul.f32 %v463, 10.0
        %v641 = vmul.f32 %v467, 10.0
        %v642 = vmul.f32 %v469, 10.0
        %v643 = vmul.f32 %v473, 10.0
        %v644 = vmul.f32 %v475, 10.0
        %v645 = vmul.f32 %v479, 10.0
        %v646 = vmul.f32 %v481, 10.0
        %v647 = vmul.f32 %v485, 10.0
        %v648 = vmul.f32 %v487, 10.0
        %v649 = vmul.f32 %v491, 10.0
        %v650 = vmul.f32 %v493, 10.0
        %v651 = vmul.f32 %v497, 10.0
        %v652 = vmul.f32 %v499, 10.0
        %v653 = vmul.f32 %v503, 10.0
        %v654 = vmul.f32 %v505, 10.0
        %v655 = vmul.f32 %v509, 10.0
        %v656 = vmul.f32 %v511, 10.0
        %v657 = vmul.f32 %v515, 10.0
        %v658 = vmul.f32 %v517, 10.0
        %v659 = vmul.f32 %v521, 10.0
        %v660 = vmul.f32 %v523, 10.0
        %v661 = vmul.f32 %v527, 10.0
        %v662 = vmul.f32 %v529, 10.0
        %v663 = vmul.f32 %v533, 10.0
        %v664 = vmul.f32 %v535, 10.0
        %v665 = vmul.f32 %v539, 10.0
        %v666 = vmul.f32 %v541, 10.0
        %v667 = vmul.f32 %v545, 10.0
        %v668 = vmul.f32 %v547, 10.0
        %v669 = vmul.f32 %v551, 10.0
        %v670 = vmul.f32 %v553, 10.0
        %v671 = vmul.f32 %v557, 10.0
        %v672 = vmul.f32 %v559, 10.0
        %v673 = vmul.f32 %v563, 10.0
        %v674 = vmul.f32 %v565, 10.0
        %v675 = vmul.f32 %v569, 10.0
        %v676 = vmul.f32 %v571, 10.0
        %v677 = vmul.f32 %v575, 10.0
        %v678 = vmul.f32 %v577, 10.0
        %v679 = vmul.f32 %v581, 10.0
        %v680 = vmul.f32 %v583, 10.0
        %v681 = vmul.f32 %v587, 10.0
        %v682 = vmul.f32 %v589, 10.0
        %v683 = vmul.f32 %v593, 10.0
        %v684 = vmul.f32 %v595, 10.0
        %v685 = vmul.f32 %v599, 10.0
        %v686 = vmul.f32 %v601, 10.0
        %v687 = vmul.f32 %v605, 10.0
        %v688 = vmul.f32 %v607, 10.0
        %v689 = vmul.f32 %v611, 10.0
        %v690 = vmul.f32 %v613, 10.0
        %v691 = vmul.f32 %v617, 10.0
        %v692 = vmul.f32 %v619, 10.0
        %v693 = vmul.f32 %v623, 10.0
        %v694 = vmul.f32 %v625, 10.0
        %v695 = vmul.f32 %v629, 10.0
        %v696 = vmul.f32 %v631, 10.0
        %v697 = vmax.f32 %v633, %v637
        %v698 = vmax.f32 %v635, %v639
        %v699 = vmax.f32 %v697, %v641
        %v700 = vmax.f32 %v698, %v643
        %v701 = vmax.f32 %v699, %v645
        %v702 = vmax.f32 %v700, %v647
        %v703 = vmax.f32 %v701, %v649
        %v704 = vmax.f32 %v702, %v651
        %v705 = vmax.f32 %v703, %v653
        %v706 = vmax.f32 %v704, %v655
        %v707 = vmax.f32 %v705, %v657
        %v708 = vmax.f32 %v706, %v659
        %v709 = vmax.f32 %v707, %v661
        %v710 = vmax.f32 %v708, %v663
        %v711 = vmax.f32 %v709, %v665
        %v712 = vmax.f32 %v710, %v667
        %v713 = vmax.f32 %v711, %v669
        %v714 = vmax.f32 %v712, %v671
        %v715 = vmax.f32 %v713, %v673
        %v716 = vmax.f32 %v714, %v675
        %v717 = vmax.f32 %v715, %v677
        %v718 = vmax.f32 %v716, %v679
        %v719 = vmax.f32 %v717, %v681
        %v720 = vmax.f32 %v718, %v683
        %v721 = vmax.f32 %v719, %v685
        %v722 = vmax.f32 %v720, %v687
        %v723 = vmax.f32 %v721, %v689
        %v724 = vmax.f32 %v722, %v691
        %v725 = vmax.f32 %v723, %v693
        %v726 = vmax.f32 %v724, %v695
        %v727 = vmax.f32 %v725, %v726
        %v728 = vrot.slane %v727, 4
        %v729 = vmax.f32 %v727, %v728
        %v730 = vrot.slane %v729, 2
        %v731 = vmax.f32 %v729, %v730
        %v732 = vrot.slane %v731, 1
        %v733 = vmax.f32 %v731, %v732
        %v734 = vmax.f32 %v634, %v638
        %v735 = vmax.f32 %v636, %v640
        %v736 = vmax.f32 %v734, %v642
        %v737 = vmax.f32 %v735, %v644
        %v738 = vmax.f32 %v736, %v646
        %v739 = vmax.f32 %v737, %v648
        %v740 = vmax.f32 %v738, %v650
        %v741 = vmax.f32 %v739, %v652
        %v742 = vmax.f32 %v740, %v654
        %v743 = vmax.f32 %v741, %v656
        %v744 = vmax.f32 %v742, %v658
        %v745 = vmax.f32 %v743, %v660
        %v746 = vmax.f32 %v744, %v662
        %v747 = vmax.f32 %v745, %v664
        %v748 = vmax.f32 %v746, %v666
        %v749 = vmax.f32 %v747, %v668
        %v750 = vmax.f32 %v748, %v670
        %v751 = vmax.f32 %v749, %v672
        %v752 = vmax.f32 %v750, %v674
        %v753 = vmax.f32 %v751, %v676
        %v754 = vmax.f32 %v752, %v678
        %v755 = vmax.f32 %v753, %v680
        %v756 = vmax.f32 %v754, %v682
        %v757 = vmax.f32 %v755, %v684
        %v758 = vmax.f32 %v756, %v686
        %v759 = vmax.f32 %v757, %v688
        %v760 = vmax.f32 %v758, %v690
        %v761 = vmax.f32 %v759, %v692
        %v762 = vmax.f32 %v760, %v694
        %v763 = vmax.f32 %v761, %v696
        %v764 = vmax.f32 %v762, %v763
        %v765 = vrot.slane %v764, 4
        %v766 = vmax.f32 %v764, %v765
        %v767 = vrot.slane %v766, 2
        %v768 = vmax.f32 %v766, %v767
        %v769 = vrot.slane %v768, 1
        %v770 = vmax.f32 %v768, %v769
        %v771 = vld [vmem:[#allocation2] sm:$0x3]
        %v774 = vcombine.low %v733, %v770
        %v776 = vunpack.c.l.s4 1966171168
        %v777 = vunpack.c.0.s8 %v776
        %v778 = vlaneseq
        %v779 = vshrl.u32 %v778, 7
        %v780 = vsub.s32 %v777, %v779
        %v781 = vrot.slane %v774, %v780
        %v783 = vunpack.c.l.s4 1966171168
        %v784 = vunpack.c.0.s8 %v783
        %v785 = vlaneseq
        %v786 = vshrl.u32 %v785, 7
        %v787 = vsub.s32 %v784, %v786
        %v788 = vrot.slane %v781, %v787
        %v790 = vmax.f32 %v771, %v788
        %v791 = vsub.f32 %v771, %v790
        %v792 = vmul.f32 %v791, 1.442695
        %v793 = vpow.pop %v792
        %v795 = vlaneseq
        %v796 = vshrl.u32 %v795, 7
        %v797 = vsub.s32 0, %v796
        %v798 = vrot.slane %v790, %v797
        %v799 = vlaneseq
        %v800 = vshrl.u32 %v799, 7
        %v801 = vsub.s32 1, %v800
        %v802 = vrot.slane %v790, %v801
        %v805 = vsub.f32 %v633, %v798
        %v806 = vsub.f32 %v634, %v802
        %v807 = vsub.f32 %v635, %v798
        %v808 = vsub.f32 %v636, %v802
        %v809 = vsub.f32 %v637, %v798
        %v810 = vsub.f32 %v638, %v802
        %v811 = vsub.f32 %v639, %v798
        %v812 = vsub.f32 %v640, %v802
        %v813 = vsub.f32 %v641, %v798
        %v814 = vsub.f32 %v642, %v802
        %v815 = vsub.f32 %v643, %v798
        %v816 = vsub.f32 %v644, %v802
        %v817 = vsub.f32 %v645, %v798
        %v818 = vsub.f32 %v646, %v802
        %v819 = vsub.f32 %v647, %v798
        %v820 = vsub.f32 %v648, %v802
        %v821 = vsub.f32 %v649, %v798
        %v822 = vsub.f32 %v650, %v802
        %v823 = vsub.f32 %v651, %v798
        %v824 = vsub.f32 %v652, %v802
        %v825 = vsub.f32 %v653, %v798
        %v826 = vsub.f32 %v654, %v802
        %v827 = vsub.f32 %v655, %v798
        %v828 = vsub.f32 %v656, %v802
        %v829 = vsub.f32 %v657, %v798
        %v830 = vsub.f32 %v658, %v802
        %v831 = vsub.f32 %v659, %v798
        %v832 = vsub.f32 %v660, %v802
        %v833 = vsub.f32 %v661, %v798
        %v834 = vsub.f32 %v662, %v802
        %v835 = vsub.f32 %v663, %v798
        %v836 = vsub.f32 %v664, %v802
        %v837 = vsub.f32 %v665, %v798
        %v838 = vsub.f32 %v666, %v802
        %v839 = vsub.f32 %v667, %v798
        %v840 = vsub.f32 %v668, %v802
        %v841 = vsub.f32 %v669, %v798
        %v842 = vsub.f32 %v670, %v802
        %v843 = vsub.f32 %v671, %v798
        %v844 = vsub.f32 %v672, %v802
        %v845 = vsub.f32 %v673, %v798
        %v846 = vsub.f32 %v674, %v802
        %v847 = vsub.f32 %v675, %v798
        %v848 = vsub.f32 %v676, %v802
        %v849 = vsub.f32 %v677, %v798
        %v850 = vsub.f32 %v678, %v802
        %v851 = vsub.f32 %v679, %v798
        %v852 = vsub.f32 %v680, %v802
        %v853 = vsub.f32 %v681, %v798
        %v854 = vsub.f32 %v682, %v802
        %v855 = vsub.f32 %v683, %v798
        %v856 = vsub.f32 %v684, %v802
        %v857 = vsub.f32 %v685, %v798
        %v858 = vsub.f32 %v686, %v802
        %v859 = vsub.f32 %v687, %v798
        %v860 = vsub.f32 %v688, %v802
        %v861 = vsub.f32 %v689, %v798
        %v862 = vsub.f32 %v690, %v802
        %v863 = vsub.f32 %v691, %v798
        %v864 = vsub.f32 %v692, %v802
        %v865 = vsub.f32 %v693, %v798
        %v866 = vsub.f32 %v694, %v802
        %v867 = vsub.f32 %v695, %v798
        %v868 = vsub.f32 %v696, %v802
        %v869 = vmul.f32 %v805, 1.442695
        %v870 = vpow.pop %v869
        %v871 = vmul.f32 %v806, 1.442695
        %v872 = vpow.pop %v871
        %v873 = vmul.f32 %v807, 1.442695
        %v874 = vpow.pop %v873
        %v875 = vmul.f32 %v808, 1.442695
        %v876 = vpow.pop %v875
        %v877 = vmul.f32 %v809, 1.442695
        %v878 = vpow.pop %v877
        %v879 = vmul.f32 %v810, 1.442695
        %v880 = vpow.pop %v879
        %v881 = vmul.f32 %v811, 1.442695
        %v882 = vpow.pop %v881
        %v883 = vmul.f32 %v812, 1.442695
        %v884 = vpow.pop %v883
        %v885 = vmul.f32 %v813, 1.442695
        %v886 = vpow.pop %v885
        %v887 = vmul.f32 %v814, 1.442695
        %v888 = vpow.pop %v887
        %v889 = vmul.f32 %v815, 1.442695
        %v890 = vpow.pop %v889
        %v891 = vmul.f32 %v816, 1.442695
        %v892 = vpow.pop %v891
        %v893 = vmul.f32 %v817, 1.442695
        %v894 = vpow.pop %v893
        %v895 = vmul.f32 %v818, 1.442695
        %v896 = vpow.pop %v895
        %v897 = vmul.f32 %v819, 1.442695
        %v898 = vpow.pop %v897
        %v899 = vmul.f32 %v820, 1.442695
        %v900 = vpow.pop %v899
        %v901 = vmul.f32 %v821, 1.442695
        %v902 = vpow.pop %v901
        %v903 = vmul.f32 %v822, 1.442695
        %v904 = vpow.pop %v903
        %v905 = vmul.f32 %v823, 1.442695
        %v906 = vpow.pop %v905
        %v907 = vmul.f32 %v824, 1.442695
        %v908 = vpow.pop %v907
        %v909 = vmul.f32 %v825, 1.442695
        %v910 = vpow.pop %v909
        %v911 = vmul.f32 %v826, 1.442695
        %v912 = vpow.pop %v911
        %v913 = vmul.f32 %v827, 1.442695
        %v914 = vpow.pop %v913
        %v915 = vmul.f32 %v828, 1.442695
        %v916 = vpow.pop %v915
        %v917 = vmul.f32 %v829, 1.442695
        %v918 = vpow.pop %v917
        %v919 = vmul.f32 %v830, 1.442695
        %v920 = vpow.pop %v919
        %v921 = vmul.f32 %v831, 1.442695
        %v922 = vpow.pop %v921
        %v923 = vmul.f32 %v832, 1.442695
        %v924 = vpow.pop %v923
        %v925 = vmul.f32 %v833, 1.442695
        %v926 = vpow.pop %v925
        %v927 = vmul.f32 %v834, 1.442695
        %v928 = vpow.pop %v927
        %v929 = vmul.f32 %v835, 1.442695
        %v930 = vpow.pop %v929
        %v931 = vmul.f32 %v836, 1.442695
        %v932 = vpow.pop %v931
        %v933 = vmul.f32 %v837, 1.442695
        %v934 = vpow.pop %v933
        %v935 = vmul.f32 %v838, 1.442695
        %v936 = vpow.pop %v935
        %v937 = vmul.f32 %v839, 1.442695
        %v938 = vpow.pop %v937
        %v939 = vmul.f32 %v840, 1.442695
        %v940 = vpow.pop %v939
        %v941 = vmul.f32 %v841, 1.442695
        %v942 = vpow.pop %v941
        %v943 = vmul.f32 %v842, 1.442695
        %v944 = vpow.pop %v943
        %v945 = vmul.f32 %v843, 1.442695
        %v946 = vpow.pop %v945
        %v947 = vmul.f32 %v844, 1.442695
        %v948 = vpow.pop %v947
        %v949 = vmul.f32 %v845, 1.442695
        %v950 = vpow.pop %v949
        %v951 = vmul.f32 %v846, 1.442695
        %v952 = vpow.pop %v951
        %v953 = vmul.f32 %v847, 1.442695
        %v954 = vpow.pop %v953
        %v955 = vmul.f32 %v848, 1.442695
        %v956 = vpow.pop %v955
        %v957 = vmul.f32 %v849, 1.442695
        %v958 = vpow.pop %v957
        %v959 = vmul.f32 %v850, 1.442695
        %v960 = vpow.pop %v959
        %v961 = vmul.f32 %v851, 1.442695
        %v962 = vpow.pop %v961
        %v963 = vmul.f32 %v852, 1.442695
        %v964 = vpow.pop %v963
        %v965 = vmul.f32 %v853, 1.442695
        %v966 = vpow.pop %v965
        %v967 = vmul.f32 %v854, 1.442695
        %v968 = vpow.pop %v967
        %v969 = vmul.f32 %v855, 1.442695
        %v970 = vpow.pop %v969
        %v971 = vmul.f32 %v856, 1.442695
        %v972 = vpow.pop %v971
        %v973 = vmul.f32 %v857, 1.442695
        %v974 = vpow.pop %v973
        %v975 = vmul.f32 %v858, 1.442695
        %v976 = vpow.pop %v975
        %v977 = vmul.f32 %v859, 1.442695
        %v978 = vpow.pop %v977
        %v979 = vmul.f32 %v860, 1.442695
        %v980 = vpow.pop %v979
        %v981 = vmul.f32 %v861, 1.442695
        %v982 = vpow.pop %v981
        %v983 = vmul.f32 %v862, 1.442695
        %v984 = vpow.pop %v983
        %v985 = vmul.f32 %v863, 1.442695
        %v986 = vpow.pop %v985
        %v987 = vmul.f32 %v864, 1.442695
        %v988 = vpow.pop %v987
        %v989 = vmul.f32 %v865, 1.442695
        %v990 = vpow.pop %v989
        %v991 = vmul.f32 %v866, 1.442695
        %v992 = vpow.pop %v991
        %v993 = vmul.f32 %v867, 1.442695
        %v994 = vpow.pop %v993
        %v995 = vmul.f32 %v868, 1.442695
        %v996 = vpow.pop %v995
        %v997 = vld [vmem:[%s264] sm:$0xff]
        %v998 = vld [vmem:[%s264 + $0x8] sm:$0xff]
        %999 = vmatprep.subr.mxu0 %v932
        %1000 = vmatpush1.msra.mxu0 %v930
        %1001 = vmatprep.subr.mxu0 %v928
        %1002 = vmatpush1.msra.mxu0 %v926
        %1003 = vmatprep.subr.mxu0 %v924
        %1004 = vmatpush1.msra.mxu0 %v922
        %1005 = vmatprep.subr.mxu0 %v920
        %1006 = vmatpush1.msra.mxu0 %v918
        %1007 = vmatprep.subr.mxu0 %v916
        %1008 = vmatpush1.msra.mxu0 %v914
        %1009 = vmatprep.subr.mxu0 %v912
        %1010 = vmatpush1.msra.mxu0 %v910
        %1011 = vmatprep.subr.mxu0 %v908
        %1012 = vmatpush1.msra.mxu0 %v906
        %1013 = vmatprep.subr.mxu0 %v904
        %1014 = vmatpush1.msra.mxu0 %v902
        %1015 = vmatprep.subr.mxu0 %v900
        %1016 = vmatpush1.msra.mxu0 %v898
        %1017 = vmatprep.subr.mxu0 %v896
        %1018 = vmatpush1.msra.mxu0 %v894
        %1019 = vmatprep.subr.mxu0 %v892
        %1020 = vmatpush1.msra.mxu0 %v890
        %1021 = vmatprep.subr.mxu0 %v888
        %1022 = vmatpush1.msra.mxu0 %v886
        %1023 = vmatprep.subr.mxu0 %v884
        %1024 = vmatpush1.msra.mxu0 %v882
        %1025 = vmatprep.subr.mxu0 %v880
        %1026 = vmatpush1.msra.mxu0 %v878
        %1027 = vmatprep.subr.mxu0 %v876
        %1028 = vmatpush1.msra.mxu0 %v874
        %1029 = vmatprep.subr.mxu0 %v872
        %1030 = vmatpush1.msra.mxu0 %v870
        %1031 = vmatprep.subr.mxu0 %v996
        %1032 = vmatpush2.msra.mxu0 %v994
        %1033 = vmatprep.subr.mxu0 %v992
        %1034 = vmatpush2.msra.mxu0 %v990
        %1035 = vmatprep.subr.mxu0 %v988
        %1036 = vmatpush2.msra.mxu0 %v986
        %1037 = vmatprep.subr.mxu0 %v984
        %1038 = vmatpush2.msra.mxu0 %v982
        %1039 = vmatprep.subr.mxu0 %v980
        %1040 = vmatpush2.msra.mxu0 %v978
        %1041 = vmatprep.subr.mxu0 %v976
        %1042 = vmatpush2.msra.mxu0 %v974
        %1043 = vmatprep.subr.mxu0 %v972
        %1044 = vmatpush2.msra.mxu0 %v970
        %1045 = vmatprep.subr.mxu0 %v968
        %1046 = vmatpush2.msra.mxu0 %v966
        %1047 = vmatprep.subr.mxu0 %v964
        %1048 = vmatpush2.msra.mxu0 %v962
        %1049 = vmatprep.subr.mxu0 %v960
        %1050 = vmatpush2.msra.mxu0 %v958
        %1051 = vmatprep.subr.mxu0 %v956
        %1052 = vmatpush2.msra.mxu0 %v954
        %1053 = vmatprep.subr.mxu0 %v952
        %1054 = vmatpush2.msra.mxu0 %v950
        %1055 = vmatprep.subr.mxu0 %v948
        %1056 = vmatpush2.msra.mxu0 %v946
        %1057 = vmatprep.subr.mxu0 %v944
        %1058 = vmatpush2.msra.mxu0 %v942
        %1059 = vmatprep.subr.mxu0 %v940
        %1060 = vmatpush2.msra.mxu0 %v938
        %1061 = vmatprep.subr.mxu0 %v936
        %1062 = vmatpush2.msra.mxu0 %v934
        %1063 = vmatprep.mubr.f32.mxu0 %v998
        %1064 = vmatmul.mubr.f32.gmra.mxu0 %v997
        %v1065 = vpop.f32.mrf.mxu0
        %v1066 = vadd.f32 0.0, %v1065
        %v1067 = vpop.f32.mrf.mxu0
        %v1068 = vadd.f32 0.0, %v1067
        %1069 = vdwg.mxu0
        %v1070 = vld [vmem:[#allocation3] sm:$0xff]
        %v1071 = vld [vmem:[#allocation3 + $0x8] sm:$0xff]
        %v1073 = vlaneseq
        %v1074 = vshrl.u32 %v1073, 7
        %v1075 = vsub.s32 0, %v1074
        %v1076 = vrot.slane %v793, %v1075
        %v1077 = vlaneseq
        %v1078 = vshrl.u32 %v1077, 7
        %v1079 = vsub.s32 1, %v1078
        %v1080 = vrot.slane %v793, %v1079
        %v1083 = vmul.f32 %v1076, %v1070
        %v1084 = vmul.f32 %v1080, %v1071
        %v1085 = vadd.f32 %v1083, %v1066
        %v1086 = vadd.f32 %v1084, %v1068
        %1087 = vst [vmem:[#allocation3] sm:$0xff] %v1085
        %1088 = vst [vmem:[#allocation3 + $0x8] sm:$0xff] %v1086
        %v1089 = vlaneseq
        %vm1090 = vcmp.ge.s32.totalorder %v1089, 0
        %vm1091 = vcmp.lt.s32.totalorder %v1089, 256
        %vm1092 = vmand %vm1090, %vm1091
        %1093 = vst.msk [vmem:[#allocation2] sm:$0x3] %vm1092, %v790
        // Predicated region
        $region49: #{tpu_custom_call.1} parent=31 // pred_check
          %p1094 = pneg %p301
        $region50: #{tpu_custom_call.1} parent=31 // pred_check_branch
          %1096 = sbr.rel (%p1094) target = $region52
        $region51: #{tpu_custom_call.1} parent=31 // pred_region
          %v1097 = vld [vmem:[#allocation3] sm:$0xff]
          %v1098 = vld [vmem:[#allocation3 + $0x8] sm:$0xff]
          %v1099 = vrcp.pop %v1097
          %v1100 = vrcp.pop %v1098
          %v1101 = vmul.f32 %v1097, %v1099
          %v1102 = vmul.f32 %v1098, %v1100
          %v1103 = vsub.f32 2.0, %v1101
          %v1104 = vsub.f32 2.0, %v1102
          %v1105 = vmul.f32 %v1099, %v1103
          %v1106 = vmul.f32 %v1100, %v1104
          %v1107 = vlaneseq
          %v1108 = vshrl.u32 %v1107, 7
          %v1109 = vsub.s32 2, %v1108
          %v1110 = vrot.slane %v1105, %v1109
          %v1111 = vlaneseq
          %v1112 = vshrl.u32 %v1111, 7
          %v1113 = vsub.s32 2, %v1112
          %v1114 = vrot.slane %v1106, %v1113
          %v1115 = vmul.f32 %v1097, %v1110
          %v1116 = vmul.f32 %v1098, %v1114
          %v1119 = vcombine.low %v1115, %v1116
          %v1121 = vunpack.c.l.s4 1983009808
          %v1122 = vunpack.c.0.s8 %v1121
          %v1123 = vlaneseq
          %v1124 = vshrl.u32 %v1123, 7
          %v1125 = vsub.s32 %v1122, %v1124
          %v1126 = vrot.slane %v1119, %v1125
          %1128 = vst [vmem:[%s296] sm:$0xf] %v1126
        $region52: #{tpu_custom_call.1} parent=31 // pred_fallthru
          _
        %s1129 = sand.u32 %s136, 1
        %s1130 = scalar_lea.sflag [#allocation6], %s1129
        %s1131 = sand.u32 %s136, 1
        %s1132 = smul.addr %s1131, 4
        %s1133 = scalar_lea.vmem [#allocation10], %s1132
        // Predicated region
        $region53: #{tpu_custom_call.1} parent=31 // pred_check
          %p1134 = pneg %p146
        $region54: #{tpu_custom_call.1} parent=31 // pred_check_branch
          %1136 = sbr.rel (%p1134) target = $region56
        $region55: #{tpu_custom_call.1} parent=31 // pred_region
          %s1137 = smul.u32 2, %s29
          %s1139 = ssub.s32 64, 64
          %1140 = vsyncadd %s1130, %s1139
          %s1141 = smul.addr %s28, 2
          %s1142 = sadd.s32 %s1137, %s1141
          %s1143 = smul.addr %s1142, 32
          %s1144 = scalar_lea.hbm %s3, %s1143
          %s1146 = sshll.u32 %s1133, 4
          %s1147 = int_to_ptr.vmem [resolvable:$true] %s1146
          %1149 = dma.vmem_to_hbm [thread:$0]  %s1147, 64, %s1144, %s1130
        $region56: #{tpu_custom_call.1} parent=31 // pred_fallthru
          _
      $region32: #{tpu_custom_call.1} parent=5 // pred_fallthru
        _
      %p1150 = scmp.le.s32.totalorder 2, %s18
      // Predicated region
      $region57: #{tpu_custom_call.1} parent=5 // pred_check
        %p1151 = pneg %p1150
      $region58: #{tpu_custom_call.1} parent=5 // pred_check_branch
        %1153 = sbr.rel (%p1151) target = $region60
      $region59: #{tpu_custom_call.1} parent=5 // pred_region
        %s1154 = ssub.s32 %s18, 2
        // Predicated region
        $region61: #{tpu_custom_call.1} parent=59 // pred_check
          %p1155 = pneg %p152
        $region62: #{tpu_custom_call.1} parent=59 // pred_check_branch
          %1157 = sbr.rel (%p1155) target = $region64
        $region63: #{tpu_custom_call.1} parent=59 // pred_region
          %s1158 = sand.u32 %s137, 1
          %s1159 = scalar_lea.sflag [#allocation6], %s1158
          %s1160 = sand.u32 %s137, 1
          %s1161 = smul.addr %s1160, 4
          %s1162 = scalar_lea.vmem [#allocation10], %s1161
          %1163 = dma.done %s1159, 64
        $region64: #{tpu_custom_call.1} parent=59 // pred_fallthru
          _
      $region60: #{tpu_custom_call.1} parent=5 // pred_fallthru
        _
    $region6: #{tpu_custom_call.1} parent=1 // loop_footer
      %s22 = sadd.s32 1, %s18
    $region7: #{tpu_custom_call.1} parent=1 // loop_footer_branch
      %17 = sbr.rel target = $region3
    $region8: #{tpu_custom_call.1} parent=1 // loop_exit
      _
    %1164 = vsyncpa [#allocation5], 1
    %s1165 = scalar_lea.sflag [#allocation5], 1
    %1166 = vsyncpa %s1165, 1
    %1167 = vsyncpa [#allocation8], 1
    %s1168 = scalar_lea.sflag [#allocation8], 1
    %1169 = vsyncpa %s1168, 1
    %1170 = vsyncpa [#allocation6], 1
    %s1171 = scalar_lea.sflag [#allocation6], 1
    %1172 = vsyncpa %s1171, 1

</llo_original>
